<compile_context>
chip_gen: v7x
topology: tpu7x:2x2x1
jax: 0.10.0
libtpu: 0.0.40
codegen_flags: <defaults>
</compile_context>

<pallas_src>
import functools

import jax
import jax.numpy as jnp
from jax.experimental import pallas as pl
from jax.experimental.pallas import tpu as pltpu


def _make_lstm_kernel(input_size: int, hidden_size: int):
    I, H = input_size, hidden_size

    def kernel(seqlen_ref, x_ref, w_ref, b_ref, y_ref, hn_ref, h_scr, c_scr):
        t = pl.program_id(0)

        @pl.when(t == 0)
        def _():
            h_scr[...] = jnp.zeros_like(h_scr)
            c_scr[...] = jnp.zeros_like(c_scr)

        x_t = x_ref[0]            # (B, I)
        h_prev = h_scr[...]       # (B, H)
        c_prev = c_scr[...]       # (B, H)

        # Fused gate pre-activations: (B, 4H).  Both weight slices are static,
        # sublane-aligned views of the single stacked (I+H, 4H) slab.
        gates = (
            jnp.dot(x_t, w_ref[0:I, :], preferred_element_type=jnp.float32)
            + jnp.dot(h_prev, w_ref[I:I + H, :], preferred_element_type=jnp.float32)
            + b_ref[...]
        )

        i_g = jax.nn.sigmoid(gates[:, 0 * H:1 * H])
        f_g = jax.nn.sigmoid(gates[:, 1 * H:2 * H])
        g_g = jnp.tanh(gates[:, 2 * H:3 * H])
        o_g = jax.nn.sigmoid(gates[:, 3 * H:4 * H])

        c_new = f_g * c_prev + i_g * g_g
        h_new = o_g * jnp.tanh(c_new)

        mask = t < seqlen_ref[...]            # (B, 1) bool, broadcast over H

        h_kept = jnp.where(mask, h_new, h_prev)
        c_kept = jnp.where(mask, c_new, c_prev)
        h_scr[...] = h_kept
        c_scr[...] = c_kept

        # Padded output: zeros beyond each sequence length (pad_packed_sequence).
        y_ref[0] = jnp.where(mask, h_new, 0.0).astype(y_ref.dtype)

        # Final hidden state (frozen at each row's last valid step).  Constant
        # output index_map => single HBM writeback at kernel end.
        hn_ref[...] = h_kept.astype(hn_ref.dtype)

    return kernel


def masked_lstm(input_tensor, seq_lens, w_ih, w_hh, b_ih, b_hh,
                *, batch_first: bool = False):
    """JAX/Pallas equivalent of MaskedLSTM.forward (1 layer, unidirectional).

    input_tensor: (T, B, I) if not batch_first else (B, T, I)
    seq_lens:     (B,) int
    w_ih: (4H, I), w_hh: (4H, H), b_ih/b_hh: (4H,)   (PyTorch gate order i,f,g,o)

    Returns (y_padded, h_n) with y_padded in the same time/batch layout as the
    input and h_n of shape (B, H).
    """
    x = jnp.asarray(input_tensor, jnp.float32)
    if batch_first:
        x = jnp.swapaxes(x, 0, 1)                       # -> (T, B, I)
    T, B, I = x.shape
    H = w_hh.shape[1]

    # Wrapper-side fusion: one weight slab, one bias row, one seq_lens column.
    w = jnp.concatenate(
        [jnp.asarray(w_ih, jnp.float32).T, jnp.asarray(w_hh, jnp.float32).T],
        axis=0)                                         # (I+H, 4H)
    b = (jnp.asarray(b_ih, jnp.float32)
         + jnp.asarray(b_hh, jnp.float32)).reshape(1, 4 * H)
    lens = jnp.asarray(seq_lens, jnp.int32).reshape(B, 1)

    kernel = _make_lstm_kernel(I, H)

    y, h_n = pl.pallas_call(
        kernel,
        grid=(T,),
        in_specs=[
            pl.BlockSpec((B, 1), lambda t: (0, 0)),          # seq_lens (resident)
            pl.BlockSpec((1, B, I), lambda t: (t, 0, 0)),    # x_t (pipelined)
            pl.BlockSpec((I + H, 4 * H), lambda t: (0, 0)),  # stacked weights
            pl.BlockSpec((1, 4 * H), lambda t: (0, 0)),      # fused bias
        ],
        out_specs=(
            pl.BlockSpec((1, B, H), lambda t: (t, 0, 0)),    # y_t
            pl.BlockSpec((B, H), lambda t: (0, 0)),          # h_n (resident)
        ),
        out_shape=(
            jax.ShapeDtypeStruct((T, B, H), jnp.float32),
            jax.ShapeDtypeStruct((B, H), jnp.float32),
        ),
        scratch_shapes=[
            pltpu.VMEM((B, H), jnp.float32),                 # h state
            pltpu.VMEM((B, H), jnp.float32),                 # c state
        ],
        compiler_params=pltpu.CompilerParams(
            dimension_semantics=("arbitrary",)),             # time recurrence
    )(lens, x, w, b)

    if batch_first:
        y = jnp.swapaxes(y, 0, 1)
    return y, h_n


def _reference(x, seq_lens, w_ih, w_hh, b_ih, b_hh):
    """Pure-JAX reference matching pack->LSTM->pad semantics."""
    T, B, I = x.shape
    H = w_hh.shape[1]
    h = jnp.zeros((B, H), jnp.float32)
    c = jnp.zeros((B, H), jnp.float32)
    ys = []
    for t in range(T):
        gates = x[t] @ w_ih.T + h @ w_hh.T + b_ih + b_hh
        i_g = jax.nn.sigmoid(gates[:, 0 * H:1 * H])
        f_g = jax.nn.sigmoid(gates[:, 1 * H:2 * H])
        g_g = jnp.tanh(gates[:, 2 * H:3 * H])
        o_g = jax.nn.sigmoid(gates[:, 3 * H:4 * H])
        c_new = f_g * c + i_g * g_g
        h_new = o_g * jnp.tanh(c_new)
        mask = (t < seq_lens)[:, None]
        h = jnp.where(mask, h_new, h)
        c = jnp.where(mask, c_new, c)
        ys.append(jnp.where(mask, h_new, 0.0))
    return jnp.stack(ys, axis=0), h


if __name__ == "__main__":
    # Small shapes consistent with the module: seq=8, batch=2, input=16, hidden=32.
    T, B, I, H = 8, 2, 16, 32

    key = jax.random.PRNGKey(0)
    kx, k1, k2, k3, k4 = jax.random.split(key, 5)

    x = jax.random.normal(kx, (T, B, I), dtype=jnp.float32)
    seq_lens = jnp.array([8, 5], dtype=jnp.int32)           # variable lengths

    scale = 1.0 / jnp.sqrt(H)                               # PyTorch LSTM default init
    w_ih = jax.random.uniform(k1, (4 * H, I), jnp.float32, -scale, scale)
    w_hh = jax.random.uniform(k2, (4 * H, H), jnp.float32, -scale, scale)
    b_ih = jax.random.uniform(k3, (4 * H,), jnp.float32, -scale, scale)
    b_hh = jax.random.uniform(k4, (4 * H,), jnp.float32, -scale, scale)

    y, h_n = masked_lstm(x, seq_lens, w_ih, w_hh, b_ih, b_hh, batch_first=False)
    y = jax.block_until_ready(y)
    h_n = jax.block_until_ready(h_n)

    y_ref, h_ref = _reference(x, seq_lens, w_ih, w_hh, b_ih, b_hh)
    assert jnp.allclose(y, y_ref, rtol=1e-5, atol=1e-5), "y mismatch"
    assert jnp.allclose(h_n, h_ref, rtol=1e-5, atol=1e-5), "h_n mismatch"
    # Check padded region is exactly zero (pad_packed_sequence semantics).
    assert jnp.all(y[5:, 1, :] == 0.0), "padding not zeroed"

    print("KERNEL_OK")
</pallas_src>

<mosaic_0001>
module attributes {stable_mosaic.version = 11 : i64} {
  func.func @kernel(%arg0: i32, %arg1: memref<2x1xi32, #tpu.memory_space<vmem>>, %arg2: memref<1x2x16xf32, #tpu.memory_space<vmem>>, %arg3: memref<48x128xf32, #tpu.memory_space<vmem>>, %arg4: memref<1x128xf32, #tpu.memory_space<vmem>>, %arg5: memref<1x2x32xf32, #tpu.memory_space<vmem>>, %arg6: memref<2x32xf32, #tpu.memory_space<vmem>>, %arg7: memref<2x32xf32, #tpu.memory_space<vmem>>, %arg8: memref<2x32xf32, #tpu.memory_space<vmem>>) attributes {dimension_semantics = [#tpu.dimension_semantics<arbitrary>], iteration_bounds = array<i64: 8>, scalar_prefetch = 0 : i64, scratch_operands = 2 : i64, tpu.core_type = #tpu.core_type<tc>, window_params = [{pipeline_mode = #tpu.pipeline_mode<synchronous>, transform_indices = @transform_0, window_bounds = array<i64: 2, 1>}, {transform_indices = @transform_1, window_bounds = array<i64: 1, 2, 16>}, {pipeline_mode = #tpu.pipeline_mode<synchronous>, transform_indices = @transform_2, window_bounds = array<i64: 48, 128>}, {pipeline_mode = #tpu.pipeline_mode<synchronous>, transform_indices = @transform_3, window_bounds = array<i64: 1, 128>}, {transform_indices = @transform_4, window_bounds = array<i64: 1, 2, 32>}, {pipeline_mode = #tpu.pipeline_mode<synchronous>, transform_indices = @transform_5, window_bounds = array<i64: 2, 32>}]} {
    %c0_i32 = arith.constant 0 : i32
    %0 = arith.cmpi eq, %arg0, %c0_i32 : i32
    %1 = arith.extui %0 : i1 to i32
    %c0_i32_0 = arith.constant 0 : i32
    %2 = arith.cmpi ne, %1, %c0_i32_0 : i32
    scf.if %2 {
      %cst_28 = arith.constant 0.000000e+00 : f32
      %59 = vector.broadcast %cst_28 : f32 to vector<2x32xf32>
      %c0_29 = arith.constant 0 : index
      %c0_30 = arith.constant 0 : index
      %60 = vector.load %arg7[%c0_29, %c0_30] : memref<2x32xf32, #tpu.memory_space<vmem>>, vector<2x32xf32>
      tpu.vector_store %arg7[%c0_29, %c0_30], %59 {strides = array<i32>} : memref<2x32xf32, #tpu.memory_space<vmem>>, vector<2x32xf32>,
      %cst_31 = arith.constant 0.000000e+00 : f32
      %61 = vector.broadcast %cst_31 : f32 to vector<2x32xf32>
      %c0_32 = arith.constant 0 : index
      %c0_33 = arith.constant 0 : index
      %62 = vector.load %arg8[%c0_32, %c0_33] : memref<2x32xf32, #tpu.memory_space<vmem>>, vector<2x32xf32>
      tpu.vector_store %arg8[%c0_32, %c0_33], %61 {strides = array<i32>} : memref<2x32xf32, #tpu.memory_space<vmem>>, vector<2x32xf32>,
    } else {
    }
    %c0 = arith.constant 0 : index
    %c0_1 = arith.constant 0 : index
    %c0_2 = arith.constant 0 : index
    %3 = vector.load %arg2[%c0, %c0_1, %c0_2] : memref<1x2x16xf32, #tpu.memory_space<vmem>>, vector<1x2x16xf32>
    %4 = vector.shape_cast %3 : vector<1x2x16xf32> to vector<2x16xf32>
    %c0_3 = arith.constant 0 : index
    %c0_4 = arith.constant 0 : index
    %5 = vector.load %arg7[%c0_3, %c0_4] : memref<2x32xf32, #tpu.memory_space<vmem>>, vector<2x32xf32>
    %c0_5 = arith.constant 0 : index
    %c0_6 = arith.constant 0 : index
    %6 = vector.load %arg8[%c0_5, %c0_6] : memref<2x32xf32, #tpu.memory_space<vmem>>, vector<2x32xf32>
    %c0_7 = arith.constant 0 : index
    %c0_8 = arith.constant 0 : index
    %7 = vector.load %arg3[%c0_7, %c0_8] : memref<48x128xf32, #tpu.memory_space<vmem>>, vector<16x128xf32>
    %cst = arith.constant dense<0.000000e+00> : vector<2x128xf32>
    %8 = tpu.matmul %4, %7, %cst {dimension_numbers = #tpu.dot_dimension_numbers<[1], [0], [0], [1], [0, 0, 1, 1], [], []>} : vector<2x16xf32>, vector<16x128xf32>, vector<2x128xf32> -> vector<2x128xf32>
    %c16 = arith.constant 16 : index
    %c0_9 = arith.constant 0 : index
    %9 = vector.load %arg3[%c16, %c0_9] : memref<48x128xf32, #tpu.memory_space<vmem>>, vector<32x128xf32>
    %cst_10 = arith.constant dense<0.000000e+00> : vector<2x128xf32>
    %10 = tpu.matmul %5, %9, %cst_10 {dimension_numbers = #tpu.dot_dimension_numbers<[1], [0], [0], [1], [0, 0, 1, 1], [], []>} : vector<2x32xf32>, vector<32x128xf32>, vector<2x128xf32> -> vector<2x128xf32>
    %11 = arith.addf %8, %10 : vector<2x128xf32>
    %c0_11 = arith.constant 0 : index
    %c0_12 = arith.constant 0 : index
    %12 = vector.load %arg4[%c0_11, %c0_12] : memref<1x128xf32, #tpu.memory_space<vmem>>, vector<1x128xf32>
    %13 = vector.broadcast %12 : vector<1x128xf32> to vector<2x128xf32>
    %14 = arith.addf %11, %13 : vector<2x128xf32>
    %15 = vector.extract_strided_slice %14 {offsets = [0, 0], sizes = [2, 32], strides = [1, 1]} : vector<2x128xf32> to vector<2x32xf32>
    %16 = arith.negf %15 : vector<2x32xf32>
    %17 = math.exp %16 : vector<2x32xf32>
    %cst_13 = arith.constant 1.000000e+00 : f32
    %18 = vector.broadcast %cst_13 : f32 to vector<2x32xf32>
    %19 = arith.addf %18, %17 : vector<2x32xf32>
    %20 = arith.divf %18, %19 : vector<2x32xf32>
    %21 = vector.extract_strided_slice %14 {offsets = [0, 32], sizes = [2, 32], strides = [1, 1]} : vector<2x128xf32> to vector<2x32xf32>
    %22 = arith.negf %21 : vector<2x32xf32>
    %23 = math.exp %22 : vector<2x32xf32>
    %cst_14 = arith.constant 1.000000e+00 : f32
    %24 = vector.broadcast %cst_14 : f32 to vector<2x32xf32>
    %25 = arith.addf %24, %23 : vector<2x32xf32>
    %26 = arith.divf %24, %25 : vector<2x32xf32>
    %27 = vector.extract_strided_slice %14 {offsets = [0, 64], sizes = [2, 32], strides = [1, 1]} : vector<2x128xf32> to vector<2x32xf32>
    %28 = math.tanh %27 : vector<2x32xf32>
    %29 = vector.extract_strided_slice %14 {offsets = [0, 96], sizes = [2, 32], strides = [1, 1]} : vector<2x128xf32> to vector<2x32xf32>
    %30 = arith.negf %29 : vector<2x32xf32>
    %31 = math.exp %30 : vector<2x32xf32>
    %cst_15 = arith.constant 1.000000e+00 : f32
    %32 = vector.broadcast %cst_15 : f32 to vector<2x32xf32>
    %33 = arith.addf %32, %31 : vector<2x32xf32>
    %34 = arith.divf %32, %33 : vector<2x32xf32>
    %35 = arith.mulf %26, %6 : vector<2x32xf32>
    %36 = arith.mulf %20, %28 : vector<2x32xf32>
    %37 = arith.addf %35, %36 : vector<2x32xf32>
    %38 = math.tanh %37 : vector<2x32xf32>
    %39 = arith.mulf %34, %38 : vector<2x32xf32>
    %c0_16 = arith.constant 0 : index
    %c0_17 = arith.constant 0 : index
    %40 = vector.load %arg1[%c0_16, %c0_17] : memref<2x1xi32, #tpu.memory_space<vmem>>, vector<2x1xi32>
    %41 = vector.broadcast %arg0 : i32 to vector<2x1xi32>
    %42 = arith.cmpi slt, %41, %40 : vector<2x1xi32>
    %43 = vector.shape_cast %42 : vector<2x1xi1> to vector<2x1xi1>
    %44 = vector.broadcast %43 : vector<2x1xi1> to vector<2x32xi1>
    %45 = arith.select %44, %39, %5 : vector<2x32xi1>, vector<2x32xf32>
    %46 = vector.shape_cast %42 : vector<2x1xi1> to vector<2x1xi1>
    %47 = vector.broadcast %46 : vector<2x1xi1> to vector<2x32xi1>
    %48 = arith.select %47, %37, %6 : vector<2x32xi1>, vector<2x32xf32>
    %c0_18 = arith.constant 0 : index
    %c0_19 = arith.constant 0 : index
    %49 = vector.load %arg7[%c0_18, %c0_19] : memref<2x32xf32, #tpu.memory_space<vmem>>, vector<2x32xf32>
    tpu.vector_store %arg7[%c0_18, %c0_19], %45 {strides = array<i32>} : memref<2x32xf32, #tpu.memory_space<vmem>>, vector<2x32xf32>,
    %c0_20 = arith.constant 0 : index
    %c0_21 = arith.constant 0 : index
    %50 = vector.load %arg8[%c0_20, %c0_21] : memref<2x32xf32, #tpu.memory_space<vmem>>, vector<2x32xf32>
    tpu.vector_store %arg8[%c0_20, %c0_21], %48 {strides = array<i32>} : memref<2x32xf32, #tpu.memory_space<vmem>>, vector<2x32xf32>,
    %cst_22 = arith.constant 0.000000e+00 : f32
    %51 = vector.shape_cast %42 : vector<2x1xi1> to vector<2x1xi1>
    %52 = vector.broadcast %51 : vector<2x1xi1> to vector<2x32xi1>
    %53 = vector.broadcast %cst_22 : f32 to vector<2x32xf32>
    %54 = arith.select %52, %39, %53 : vector<2x32xi1>, vector<2x32xf32>
    %c0_23 = arith.constant 0 : index
    %c0_24 = arith.constant 0 : index
    %c0_25 = arith.constant 0 : index
    %55 = vector.load %arg5[%c0_23, %c0_24, %c0_25] : memref<1x2x32xf32, #tpu.memory_space<vmem>>, vector<1x2x32xf32>
    %56 = vector.shape_cast %55 : vector<1x2x32xf32> to vector<2x32xf32>
    %57 = vector.shape_cast %54 : vector<2x32xf32> to vector<1x2x32xf32>
    tpu.vector_store %arg5[%c0_23, %c0_24, %c0_25], %57 {strides = array<i32>} : memref<1x2x32xf32, #tpu.memory_space<vmem>>, vector<1x2x32xf32>,
    %c0_26 = arith.constant 0 : index
    %c0_27 = arith.constant 0 : index
    %58 = vector.load %arg6[%c0_26, %c0_27] : memref<2x32xf32, #tpu.memory_space<vmem>>, vector<2x32xf32>
    tpu.vector_store %arg6[%c0_26, %c0_27], %45 {strides = array<i32>} : memref<2x32xf32, #tpu.memory_space<vmem>>, vector<2x32xf32>,
    return
  }
  func.func @transform_0(%arg0: i32) -> (i32, i32) {
    %c0_i32 = arith.constant 0 : i32
    %c0_i32_0 = arith.constant 0 : i32
    %c0_i32_1 = arith.constant 0 : i32
    return %c0_i32, %c0_i32_0 : i32, i32
  }
  func.func @transform_1(%arg0: i32) -> (i32, i32, i32) {
    %c0_i32 = arith.constant 0 : i32
    %c0_i32_0 = arith.constant 0 : i32
    %c0_i32_1 = arith.constant 0 : i32
    return %arg0, %c0_i32, %c0_i32_0 : i32, i32, i32
  }
  func.func @transform_2(%arg0: i32) -> (i32, i32) {
    %c0_i32 = arith.constant 0 : i32
    %c0_i32_0 = arith.constant 0 : i32
    %c0_i32_1 = arith.constant 0 : i32
    return %c0_i32, %c0_i32_0 : i32, i32
  }
  func.func @transform_3(%arg0: i32) -> (i32, i32) {
    %c0_i32 = arith.constant 0 : i32
    %c0_i32_0 = arith.constant 0 : i32
    %c0_i32_1 = arith.constant 0 : i32
    return %c0_i32, %c0_i32_0 : i32, i32
  }
  func.func @transform_4(%arg0: i32) -> (i32, i32, i32) {
    %c0_i32 = arith.constant 0 : i32
    %c0_i32_0 = arith.constant 0 : i32
    %c0_i32_1 = arith.constant 0 : i32
    return %arg0, %c0_i32, %c0_i32_0 : i32, i32, i32
  }
  func.func @transform_5(%arg0: i32) -> (i32, i32) {
    %c0_i32 = arith.constant 0 : i32
    %c0_i32_0 = arith.constant 0 : i32
    %c0_i32_1 = arith.constant 0 : i32
    return %c0_i32, %c0_i32_0 : i32, i32
  }
}

</mosaic_0001>

<llo_original>
// kernel: tpu_custom_call.1
$region0: #{tpu_custom_call.1}
  #allocation0 [shape = 'u32[]', space=smem, size = 0x4, offset = 0x4, fixed_abs, tag = 'smem constant byte address 0x4 - core index']
  #allocation1 [shape = 'u32[144,128]{1,0:T(1,128)}', space=vmem, size = 0x12000, scoped, tag = 'internal scratch']
  #allocation2 [shape = 'f32[2,32]{1,0:T(2,128)}', space=vmem, size = 0x400, scoped, tag = 'scratch operand']
  #allocation3 [shape = 'f32[2,32]{1,0:T(2,128)}', space=vmem, size = 0x400, scoped, tag = 'scratch operand']
  %s0 = inlined_call_operand.vmem [shape: s32[2,1], index: 0, kind: input, shape index: {}]
  %s1 = inlined_call_operand.hbm [shape: f32[8,2,16], index: 1, kind: input, shape index: {}]
  %s2 = inlined_call_operand.hbm [shape: f32[48,128], index: 2, kind: input, shape index: {}]
  %s3 = inlined_call_operand.vmem [shape: f32[1,128], index: 3, kind: input, shape index: {}]
  %s4 = inlined_call_operand.hbm [shape: f32[8,2,32], index: 4, kind: output, shape index: {0}]
  %s5 = inlined_call_operand.hbm [shape: f32[2,32], index: 5, kind: output, shape index: {1}]
  %6 = xla_tuple %s4, %s5
  %s7 = sld [smem:[#allocation0]]
  $region69: #{tpu_custom_call.1} parent=0
    _
  %s9 = ssub.s32 1, %s7
  %s10 = scalar_select 0, %s9, %s7
  $region1: #{tpu_custom_call.1} parent=0
    #allocation4 [shape = 'u8[2048]{0}', space=vmem, size = 0x800, scoped, tag = 'input window, operand 1']
    #allocation5 [shape = 's32[2]{0}', space=sflag, size = 0x8, scoped, tag = 'scoped memory for tpu_custom_call.1']
    #allocation6 [shape = 's32[2]{0}', space=sflag, size = 0x8, scoped, tag = 'scoped memory for tpu_custom_call.1']
    #allocation7 [shape = 'u8[24576]{0}', space=vmem, size = 0x6000, scoped, tag = 'input window, operand 2, single buffered']
    #allocation8 [shape = 's32[1]{0}', space=sflag, size = 0x4, scoped, tag = 'scoped memory for tpu_custom_call.1']
    #allocation9 [shape = 'u8[2048]{0}', space=vmem, size = 0x800, scoped, tag = 'output window, operand 0']
    #allocation10 [shape = 'u8[1024]{0}', space=vmem, size = 0x400, scoped, tag = 'output window, operand 1, single buffered']
    #allocation11 [shape = 's32[1]{0}', space=sflag, size = 0x4, scoped, tag = 'scoped memory for tpu_custom_call.1']
    %11 = vsyncpa [#allocation5], 0
    %s12 = scalar_lea.sflag [#allocation5], 1
    %13 = vsyncpa %s12, 0
    %14 = vsyncpa [#allocation8], 0
    %15 = vsyncpa [#allocation6], 0
    %s16 = scalar_lea.sflag [#allocation6], 1
    %17 = vsyncpa %s16, 0
    %18 = vsyncpa [#allocation11], 0
    loop: start=0, step=1, limit=10
    $region2: #{tpu_custom_call.1} parent=1 // loop_pre_header
      _
    $region3: #{tpu_custom_call.1} parent=1 // loop_header
      %s20 = sphi 0, %s24
      %p21 = scmp.ge.s32.totalorder %s20, 10
      %s28 = sphi 0, %s28
      %s30 = sphi 0, %s28
      %s31 = sphi 0, %s30
      %s45 = sphi 0, %s31
      %s51 = sphi 0, %s53
      %s54 = sphi 0, %s51
      %s55 = sphi 0, %s54
      %s71 = sphi 0, %s55
      %s75 = sphi 0, %s75
      %s77 = sphi 0, %s75
      %s78 = sphi 0, %s77
      %s92 = sphi 0, %s78
      %s96 = sphi 0, %s96
      %s98 = sphi 0, %s96
      %s99 = sphi 0, %s98
      %s113 = sphi 0, %s99
      %s119 = sphi 0, %s121
      %s122 = sphi 0, %s119
      %s123 = sphi 0, %s122
      %s139 = sphi 0, %s123
      %s143 = sphi 0, %s143
      %s145 = sphi 0, %s143
      %s146 = sphi 0, %s145
      %s160 = sphi 0, %s146
    $region4: #{tpu_custom_call.1} parent=1 // loop_header_branch
      %23 = sbr.rel (%p21) target = $region8
    $region5: #{tpu_custom_call.1} parent=1 // loop_body
      %s25 = ssub.s32 %s20, 1
      %s26 = ssub.s32 %s20, 2
      %s27 = sadd.s32 %s20, 1
      %s29 = sadd.s32 %s28, 1
      %p32 = scmp.eq.s32.totalorder %s20, 7
      %p33 = scmp.ne.s32.totalorder %s28, %s30
      %p34 = scmp.eq.s32.totalorder %s20, 0
      %p35 = por %p33, %p34
      %p36 = scmp.ne.s32.totalorder %s28, %s30
      %p37 = scmp.eq.s32.totalorder %s25, 7
      %p38 = por %p36, %p37
      %p39 = scmp.ne.s32.totalorder %s30, %s31
      %p40 = scmp.eq.s32.totalorder %s25, 0
      %p41 = por %p39, %p40
      %p42 = scmp.ne.s32.totalorder %s30, %s31
      %p43 = scmp.eq.s32.totalorder %s26, 7
      %p44 = por %p42, %p43
      %p46 = scmp.ne.s32.totalorder %s31, %s45
      %p47 = scmp.eq.s32.totalorder %s26, 0
      %p48 = por %p46, %p47
      %s49 = ssub.s32 %s20, %s27
      %p50 = scmp.eq.s32.totalorder %s49, 0
      %s52 = sadd.s32 %s51, 1
      %s53 = scalar_select %p50, %s51, %s52
      %p56 = pneg %p50
      %p57 = scmp.eq.s32.totalorder %s20, 7
      %p58 = por %p56, %p57
      %p59 = scmp.ne.s32.totalorder %s51, %s54
      %p60 = scmp.eq.s32.totalorder %s20, 0
      %p61 = por %p59, %p60
      %p62 = scmp.ne.s32.totalorder %s51, %s54
      %p63 = scmp.eq.s32.totalorder %s25, 7
      %p64 = por %p62, %p63
      %p65 = scmp.ne.s32.totalorder %s54, %s55
      %p66 = scmp.eq.s32.totalorder %s25, 0
      %p67 = por %p65, %p66
      %p68 = scmp.ne.s32.totalorder %s54, %s55
      %p69 = scmp.eq.s32.totalorder %s26, 7
      %p70 = por %p68, %p69
      %p72 = scmp.ne.s32.totalorder %s55, %s71
      %p73 = scmp.eq.s32.totalorder %s26, 0
      %p74 = por %p72, %p73
      %s76 = sadd.s32 %s75, 1
      %p79 = scmp.eq.s32.totalorder %s20, 7
      %p80 = scmp.ne.s32.totalorder %s75, %s77
      %p81 = scmp.eq.s32.totalorder %s20, 0
      %p82 = por %p80, %p81
      %p83 = scmp.ne.s32.totalorder %s75, %s77
      %p84 = scmp.eq.s32.totalorder %s25, 7
      %p85 = por %p83, %p84
      %p86 = scmp.ne.s32.totalorder %s77, %s78
      %p87 = scmp.eq.s32.totalorder %s25, 0
      %p88 = por %p86, %p87
      %p89 = scmp.ne.s32.totalorder %s77, %s78
      %p90 = scmp.eq.s32.totalorder %s26, 7
      %p91 = por %p89, %p90
      %p93 = scmp.ne.s32.totalorder %s78, %s92
      %p94 = scmp.eq.s32.totalorder %s26, 0
      %p95 = por %p93, %p94
      %s97 = sadd.s32 %s96, 1
      %p100 = scmp.eq.s32.totalorder %s20, 7
      %p101 = scmp.ne.s32.totalorder %s96, %s98
      %p102 = scmp.eq.s32.totalorder %s20, 0
      %p103 = por %p101, %p102
      %p104 = scmp.ne.s32.totalorder %s96, %s98
      %p105 = scmp.eq.s32.totalorder %s25, 7
      %p106 = por %p104, %p105
      %p107 = scmp.ne.s32.totalorder %s98, %s99
      %p108 = scmp.eq.s32.totalorder %s25, 0
      %p109 = por %p107, %p108
      %p110 = scmp.ne.s32.totalorder %s98, %s99
      %p111 = scmp.eq.s32.totalorder %s26, 7
      %p112 = por %p110, %p111
      %p114 = scmp.ne.s32.totalorder %s99, %s113
      %p115 = scmp.eq.s32.totalorder %s26, 0
      %p116 = por %p114, %p115
      %s117 = ssub.s32 %s20, %s27
      %p118 = scmp.eq.s32.totalorder %s117, 0
      %s120 = sadd.s32 %s119, 1
      %s121 = scalar_select %p118, %s119, %s120
      %p124 = pneg %p118
      %p125 = scmp.eq.s32.totalorder %s20, 7
      %p126 = por %p124, %p125
      %p127 = scmp.ne.s32.totalorder %s119, %s122
      %p128 = scmp.eq.s32.totalorder %s20, 0
      %p129 = por %p127, %p128
      %p130 = scmp.ne.s32.totalorder %s119, %s122
      %p131 = scmp.eq.s32.totalorder %s25, 7
      %p132 = por %p130, %p131
      %p133 = scmp.ne.s32.totalorder %s122, %s123
      %p134 = scmp.eq.s32.totalorder %s25, 0
      %p135 = por %p133, %p134
      %p136 = scmp.ne.s32.totalorder %s122, %s123
      %p137 = scmp.eq.s32.totalorder %s26, 7
      %p138 = por %p136, %p137
      %p140 = scmp.ne.s32.totalorder %s123, %s139
      %p141 = scmp.eq.s32.totalorder %s26, 0
      %p142 = por %p140, %p141
      %s144 = sadd.s32 %s143, 1
      %p147 = scmp.eq.s32.totalorder %s20, 7
      %p148 = scmp.ne.s32.totalorder %s143, %s145
      %p149 = scmp.eq.s32.totalorder %s20, 0
      %p150 = por %p148, %p149
      %p151 = scmp.ne.s32.totalorder %s143, %s145
      %p152 = scmp.eq.s32.totalorder %s25, 7
      %p153 = por %p151, %p152
      %p154 = scmp.ne.s32.totalorder %s145, %s146
      %p155 = scmp.eq.s32.totalorder %s25, 0
      %p156 = por %p154, %p155
      %p157 = scmp.ne.s32.totalorder %s145, %s146
      %p158 = scmp.eq.s32.totalorder %s26, 7
      %p159 = por %p157, %p158
      %p161 = scmp.ne.s32.totalorder %s146, %s160
      %p162 = scmp.eq.s32.totalorder %s26, 0
      %p163 = por %p161, %p162
      %p164 = scmp.le.s32.totalorder 1, %s20
      %p165 = scmp.lt.s32.totalorder %s20, 9
      %p166 = pnand %p164, %p165
      %p167 = pneg %p166
      // Predicated region
      $region9: #{tpu_custom_call.1} parent=5 // pred_check
        _
      $region10: #{tpu_custom_call.1} parent=5 // pred_check_branch
        %169 = sbr.rel (%p166) target = $region12
      $region11: #{tpu_custom_call.1} parent=5 // pred_region
        %s170 = ssub.s32 %s20, 1
        // Predicated region
        $region13: #{tpu_custom_call.1} parent=11 // pred_check
          %p171 = pneg %p41
        $region14: #{tpu_custom_call.1} parent=11 // pred_check_branch
          %173 = sbr.rel (%p171) target = $region16
        $region15: #{tpu_custom_call.1} parent=11 // pred_region
          _
        $region16: #{tpu_custom_call.1} parent=11 // pred_fallthru
          _
        // Predicated region
        $region17: #{tpu_custom_call.1} parent=11 // pred_check
          %p174 = pneg %p88
        $region18: #{tpu_custom_call.1} parent=11 // pred_check_branch
          %176 = sbr.rel (%p174) target = $region20
        $region19: #{tpu_custom_call.1} parent=11 // pred_region
          %s178 = ssub.s32 768, 768
          %179 = vsyncadd [#allocation8], %s178
          %s180 = sshll.u32 [#allocation7], 4
          %s181 = int_to_ptr.vmem [resolvable:$true] %s180
          %186 = dma.hbm_to_vmem [thread:$0]  %s2, 768, %s181, [#allocation8], 128, 128, 8
        $region20: #{tpu_custom_call.1} parent=11 // pred_fallthru
          _
        // Predicated region
        $region21: #{tpu_custom_call.1} parent=11 // pred_check
          %p187 = pneg %p109
        $region22: #{tpu_custom_call.1} parent=11 // pred_check_branch
          %189 = sbr.rel (%p187) target = $region24
        $region23: #{tpu_custom_call.1} parent=11 // pred_region
          _
        $region24: #{tpu_custom_call.1} parent=11 // pred_fallthru
          _
      $region12: #{tpu_custom_call.1} parent=5 // pred_fallthru
        _
      %p190 = scmp.lt.s32.totalorder %s20, 8
      // Predicated region
      $region25: #{tpu_custom_call.1} parent=5 // pred_check
        %p191 = pneg %p190
      $region26: #{tpu_custom_call.1} parent=5 // pred_check_branch
        %193 = sbr.rel (%p191) target = $region28
      $region27: #{tpu_custom_call.1} parent=5 // pred_region
        // Predicated region
        $region29: #{tpu_custom_call.1} parent=27 // pred_check
          %p194 = pneg %p61
        $region30: #{tpu_custom_call.1} parent=27 // pred_check_branch
          %196 = sbr.rel (%p194) target = $region32
        $region31: #{tpu_custom_call.1} parent=27 // pred_region
          %s197 = sand.u32 %s51, 1
          %s198 = scalar_lea.sflag [#allocation5], %s197
          %s199 = sand.u32 %s51, 1
          %s200 = smul.addr %s199, 2
          %s201 = scalar_lea.vmem [#allocation4], %s200
          %s203 = ssub.s32 32, 32
          %204 = vsyncadd %s198, %s203
          %s205 = smul.addr %s20, 32
          %s206 = scalar_lea.hbm %s1, %s205
          %s208 = sshll.u32 %s201, 4
          %s209 = int_to_ptr.vmem [resolvable:$true] %s208
          %211 = dma.hbm_to_vmem [thread:$0]  %s206, 32, %s209, %s198
        $region32: #{tpu_custom_call.1} parent=27 // pred_fallthru
          _
      $region28: #{tpu_custom_call.1} parent=5 // pred_fallthru
        _
      %p212 = scmp.le.s32.totalorder 1, %s20
      %p213 = scmp.lt.s32.totalorder %s20, 9
      %p214 = pnand %p212, %p213
      %p215 = pneg %p214
      // Predicated region
      $region33: #{tpu_custom_call.1} parent=5 // pred_check
        _
      $region34: #{tpu_custom_call.1} parent=5 // pred_check_branch
        %217 = sbr.rel (%p214) target = $region36
      $region35: #{tpu_custom_call.1} parent=5 // pred_region
        %s218 = ssub.s32 %s20, 1
        %s219 = sand.u32 %s54, 1
        %s220 = scalar_lea.sflag [#allocation5], %s219
        %s221 = sand.u32 %s54, 1
        %s222 = smul.addr %s221, 2
        %s223 = scalar_lea.vmem [#allocation4], %s222
        // Predicated region
        $region37: #{tpu_custom_call.1} parent=35 // pred_check
          %p224 = pneg %p67
        $region38: #{tpu_custom_call.1} parent=35 // pred_check_branch
          %226 = sbr.rel (%p224) target = $region40
        $region39: #{tpu_custom_call.1} parent=35 // pred_region
          %227 = dma.done %s220, 32
        $region40: #{tpu_custom_call.1} parent=35 // pred_fallthru
          _
        // Predicated region
        $region41: #{tpu_custom_call.1} parent=35 // pred_check
          %p228 = pneg %p88
        $region42: #{tpu_custom_call.1} parent=35 // pred_check_branch
          %230 = sbr.rel (%p228) target = $region44
        $region43: #{tpu_custom_call.1} parent=35 // pred_region
          %231 = dma.done [#allocation8], 768
        $region44: #{tpu_custom_call.1} parent=35 // pred_fallthru
          _
        %p232 = pneg %p41
        %p233 = pneg %p38
        %s234 = sand.u32 %s54, 1
        %s235 = scalar_lea.sflag [#allocation5], %s234
        %s236 = sand.u32 %s54, 1
        %s237 = smul.addr %s236, 2
        %s238 = scalar_lea.vmem [#allocation4], %s237
        %p239 = pneg %p67
        %p240 = pneg %p64
        %p241 = pneg %p88
        %p242 = pneg %p85
        %p243 = pneg %p109
        %p244 = pneg %p106
        %p245 = pneg %p135
        %p246 = pneg %p132
        %s247 = sand.u32 %s122, 1
        %s248 = scalar_lea.sflag [#allocation6], %s247
        %s249 = sand.u32 %s122, 1
        %s250 = smul.addr %s249, 2
        %s251 = scalar_lea.vmem [#allocation9], %s250
        %p252 = pneg %p156
        %p253 = pneg %p153
        %p254 = scmp.eq.s32.totalorder %s25, 0
        // Predicated region
        $region45: #{tpu_custom_call.1} parent=35 // pred_check
          %p255 = pneg %p254
        $region46: #{tpu_custom_call.1} parent=35 // pred_check_branch
          %257 = sbr.rel (%p255) target = $region48
        $region47: #{tpu_custom_call.1} parent=35 // pred_region
          %vm258 = vcmask 254976
          %259 = vst.msk [vmem:[#allocation2] sm:$0x3] %vm258, 0.0
          %260 = vst.msk [vmem:[#allocation3] sm:$0x3] %vm258, 0.0
        $region48: #{tpu_custom_call.1} parent=35 // pred_fallthru
          _
        %v261 = vld [vmem:[%s223] sm:$0x3]
        %v262 = vld [vmem:[#allocation2] sm:$0x3]
        %v263 = vld [vmem:[#allocation3] sm:$0x3]
        %v264 = vld [vmem:[#allocation7] sm:$0xff]
        %v265 = vld [vmem:[#allocation7 + $0x8] sm:$0xff]
        %v266 = vld [vmem:[#allocation7 + $0x10] sm:$0xff]
        %v267 = vld [vmem:[#allocation7 + $0x18] sm:$0xff]
        %v268 = vld [vmem:[#allocation7 + $0x20] sm:$0xff]
        %v269 = vld [vmem:[#allocation7 + $0x28] sm:$0xff]
        %vm270 = vcmask 261120
        %v272 = vsel %vm270, %v262, 0
        %274 = vmatprep.subr.mxu0 0.0
        %275 = vmatpush1.msra.mxu0 %v266
        %276 = vmatprep.subr.mxu0 0.0
        %277 = vmatpush1.msra.mxu0 %v267
        %278 = vmatprep.subr.mxu0 0.0
        %279 = vmatpush1.msra.mxu0 %v268
        %280 = vmatprep.subr.mxu0 0.0
        %281 = vmatpush1.msra.mxu0 %v269
        %282 = vmatprep.subr.mxu0 0.0
        %283 = vmatpush1.msra.mxu0 0.0
        %284 = vmatprep.subr.mxu0 0.0
        %285 = vmatpush1.msra.mxu0 0.0
        %286 = vmatprep.subr.mxu0 0.0
        %287 = vmatpush1.msra.mxu0 0.0
        %288 = vmatprep.subr.mxu0 0.0
        %289 = vmatpush1.msra.mxu0 0.0
        %290 = vmatprep.subr.mxu0 0.0
        %291 = vmatpush1.msra.mxu0 0.0
        %292 = vmatprep.subr.mxu0 0.0
        %293 = vmatpush1.msra.mxu0 0.0
        %294 = vmatprep.subr.mxu0 0.0
        %295 = vmatpush1.msra.mxu0 0.0
        %296 = vmatprep.subr.mxu0 0.0
        %297 = vmatpush1.msra.mxu0 0.0
        %298 = vmatprep.subr.mxu0 0.0
        %299 = vmatpush1.msra.mxu0 0.0
        %300 = vmatprep.subr.mxu0 0.0
        %301 = vmatpush1.msra.mxu0 0.0
        %302 = vmatprep.subr.mxu0 0.0
        %303 = vmatpush1.msra.mxu0 0.0
        %304 = vmatprep.subr.mxu0 0.0
        %305 = vmatpush1.msra.mxu0 0.0
        %306 = vmatprep.subr.mxu0 0.0
        %307 = vmatpush1.msra.mxu0 0.0
        %308 = vmatprep.subr.mxu0 0.0
        %309 = vmatpush1.msra.mxu0 0.0
        %310 = vmatprep.subr.mxu0 0.0
        %311 = vmatpush1.msra.mxu0 0.0
        %312 = vmatprep.subr.mxu0 0.0
        %313 = vmatpush1.msra.mxu0 0.0
        %314 = vmatprep.subr.mxu0 0.0
        %315 = vmatpush1.msra.mxu0 0.0
        %316 = vmatprep.subr.mxu0 0.0
        %317 = vmatpush1.msra.mxu0 0.0
        %318 = vmatprep.subr.mxu0 0.0
        %319 = vmatpush1.msra.mxu0 0.0
        %320 = vmatprep.subr.mxu0 0.0
        %321 = vmatpush1.msra.mxu0 0.0
        %322 = vmatprep.subr.mxu0 0.0
        %323 = vmatpush1.msra.mxu0 0.0
        %324 = vmatprep.subr.mxu0 0.0
        %325 = vmatpush1.msra.mxu0 0.0
        %326 = vmatprep.subr.mxu0 0.0
        %327 = vmatpush1.msra.mxu0 0.0
        %328 = vmatprep.subr.mxu0 0.0
        %329 = vmatpush1.msra.mxu0 0.0
        %330 = vmatprep.subr.mxu0 0.0
        %331 = vmatpush1.msra.mxu0 0.0
        %332 = vmatprep.subr.mxu0 0.0
        %333 = vmatpush1.msra.mxu0 0.0
        %334 = vmatprep.subr.mxu0 0.0
        %335 = vmatpush1.msra.mxu0 0.0
        %336 = vmatprep.subr.mxu0 0.0
        %337 = vmatpush1.msra.mxu0 0.0
        %338 = vmatprep.mubr.f32.mxu0 0.0
        %339 = vmatmul.mubr.f32.gmra.mrb[0].mxu0 %v272
        %v340 = vpop.f32.mrb[0].mxu0
        %v341 = vadd.f32 0.0, %v340
        %v342 = vpop.f32.mrb[0].mxu0
        %343 = vdwg.mxu0
        %vm344 = vcmask 130048
        %v346 = vsel %vm344, %v261, 0
        %348 = vmatprep.subr.mxu0 0.0
        %349 = vmatpush1.msra.mxu0 %v264
        %350 = vmatprep.subr.mxu0 0.0
        %351 = vmatpush1.msra.mxu0 %v265
        %352 = vmatprep.subr.mxu0 0.0
        %353 = vmatpush1.msra.mxu0 0.0
        %354 = vmatprep.subr.mxu0 0.0
        %355 = vmatpush1.msra.mxu0 0.0
        %356 = vmatprep.subr.mxu0 0.0
        %357 = vmatpush1.msra.mxu0 0.0
        %358 = vmatprep.subr.mxu0 0.0
        %359 = vmatpush1.msra.mxu0 0.0
        %360 = vmatprep.subr.mxu0 0.0
        %361 = vmatpush1.msra.mxu0 0.0
        %362 = vmatprep.subr.mxu0 0.0
        %363 = vmatpush1.msra.mxu0 0.0
        %364 = vmatprep.subr.mxu0 0.0
        %365 = vmatpush1.msra.mxu0 0.0
        %366 = vmatprep.subr.mxu0 0.0
        %367 = vmatpush1.msra.mxu0 0.0
        %368 = vmatprep.subr.mxu0 0.0
        %369 = vmatpush1.msra.mxu0 0.0
        %370 = vmatprep.subr.mxu0 0.0
        %371 = vmatpush1.msra.mxu0 0.0
        %372 = vmatprep.subr.mxu0 0.0
        %373 = vmatpush1.msra.mxu0 0.0
        %374 = vmatprep.subr.mxu0 0.0
        %375 = vmatpush1.msra.mxu0 0.0
        %376 = vmatprep.subr.mxu0 0.0
        %377 = vmatpush1.msra.mxu0 0.0
        %378 = vmatprep.subr.mxu0 0.0
        %379 = vmatpush1.msra.mxu0 0.0
        %380 = vmatprep.subr.mxu0 0.0
        %381 = vmatpush1.msra.mxu0 0.0
        %382 = vmatprep.subr.mxu0 0.0
        %383 = vmatpush1.msra.mxu0 0.0
        %384 = vmatprep.subr.mxu0 0.0
        %385 = vmatpush1.msra.mxu0 0.0
        %386 = vmatprep.subr.mxu0 0.0
        %387 = vmatpush1.msra.mxu0 0.0
        %388 = vmatprep.subr.mxu0 0.0
        %389 = vmatpush1.msra.mxu0 0.0
        %390 = vmatprep.subr.mxu0 0.0
        %391 = vmatpush1.msra.mxu0 0.0
        %392 = vmatprep.subr.mxu0 0.0
        %393 = vmatpush1.msra.mxu0 0.0
        %394 = vmatprep.subr.mxu0 0.0
        %395 = vmatpush1.msra.mxu0 0.0
        %396 = vmatprep.subr.mxu0 0.0
        %397 = vmatpush1.msra.mxu0 0.0
        %398 = vmatprep.subr.mxu0 0.0
        %399 = vmatpush1.msra.mxu0 0.0
        %400 = vmatprep.subr.mxu0 0.0
        %401 = vmatpush1.msra.mxu0 0.0
        %402 = vmatprep.subr.mxu0 0.0
        %403 = vmatpush1.msra.mxu0 0.0
        %404 = vmatprep.subr.mxu0 0.0
        %405 = vmatpush1.msra.mxu0 0.0
        %406 = vmatprep.subr.mxu0 0.0
        %407 = vmatpush1.msra.mxu0 0.0
        %408 = vmatprep.subr.mxu0 0.0
        %409 = vmatpush1.msra.mxu0 0.0
        %410 = vmatprep.subr.mxu0 0.0
        %411 = vmatpush1.msra.mxu0 0.0
        %412 = vmatprep.mubr.f32.mxu0 0.0
        %413 = vmatmul.mubr.f32.gmra.mrb[0].mxu0 %v346
        %v414 = vpop.f32.mrb[0].mxu0
        %v415 = vadd.f32 %v341, %v414
        %v416 = vpop.f32.mrb[0].mxu0
        %417 = vdwg.mxu0
        %v418 = vld [vmem:[%s3] sm:$0x1]
        %v420 = vlaneseq
        %v421 = vshrl.u32 %v420, 7
        %v422 = vsub.s32 0, %v421
        %v423 = vrot.slane %v418, %v422
        %v425 = vadd.f32 %v415, %v423
        %v426 = vxor.u32 %v425, 2147483648
        %v427 = vmul.f32 %v426, 1.442695
        %v428 = vpow.pop %v427
        %v429 = vadd.f32 %v428, 1.0
        %v430 = vrcp.pop %v429
        %v431 = vmul.f32 1.0, %v430
        %v432 = vtanh.pop %v425
        %434 = vrot.lane.b32.xlu0 %v263, 32
        %v435 = vpop.permute.xlu0 %434
        %v437 = vmul.f32 %v431, %v435
        %439 = vrot.lane.b32.xlu0 %v432, 64
        %v440 = vpop.permute.xlu0 %439
        %v442 = vmul.f32 %v431, %v440
        %444 = vrot.lane.b32.xlu0 %v442, 32
        %v445 = vpop.permute.xlu0 %444
        %v447 = vadd.f32 %v437, %v445
        %v448 = vtanh.pop %v447
        %450 = vrot.lane.b32.xlu0 %v448, 64
        %v451 = vpop.permute.xlu0 %450
        %v453 = vmul.f32 %v431, %v451
        %v454 = vld [vmem:[%s0] sm:$0x3]
        %v455 = vstv %s25
        %vm456 = vcmp.lt.s32.totalorder %v455, %v454
        %v457 = vsel %vm456, 1, 0
        %458 = vset.pattern.permute.xlu0 0
        %459 = vperm.xlu0 %458, %v457
        %v460 = vpop.permute.xlu0 %459
        %vm461 = vcmp.eq.s32.totalorder %v460, 1
        %462 = vrot.lane.b32.xlu0 %v262, 96
        %v463 = vpop.permute.xlu0 %462
        %v465 = vsel %vm461, %v453, %v463
        %v466 = vsel %vm461, %v447, %v435
        %468 = vrot.lane.b32.xlu0 %v465, 32
        %v469 = vpop.permute.xlu0 %468
        %vm471 = vcmask 254976
        %472 = vst.msk [vmem:[#allocation2] sm:$0x3] %vm471, %v469
        %474 = vrot.lane.b32.xlu0 %v466, 96
        %v475 = vpop.permute.xlu0 %474
        %477 = vst.msk [vmem:[#allocation3] sm:$0x3] %vm471, %v475
        %v478 = vsel %vm461, %v453, 0.0
        %480 = vrot.lane.b32.xlu0 %v478, 32
        %v481 = vpop.permute.xlu0 %480
        %483 = vst.msk [vmem:[%s251] sm:$0x3] %vm471, %v481
        %484 = vst.msk [vmem:[#allocation10] sm:$0x3] %vm471, %v469
        %s485 = sand.u32 %s122, 1
        %s486 = scalar_lea.sflag [#allocation6], %s485
        %s487 = sand.u32 %s122, 1
        %s488 = smul.addr %s487, 2
        %s489 = scalar_lea.vmem [#allocation9], %s488
        // Predicated region
        $region49: #{tpu_custom_call.1} parent=35 // pred_check
          %p490 = pneg %p132
        $region50: #{tpu_custom_call.1} parent=35 // pred_check_branch
          %492 = sbr.rel (%p490) target = $region52
        $region51: #{tpu_custom_call.1} parent=35 // pred_region
          %s494 = ssub.s32 32, 32
          %495 = vsyncadd %s486, %s494
          %s496 = smul.addr %s25, 32
          %s497 = scalar_lea.hbm %s4, %s496
          %s499 = sshll.u32 %s489, 4
          %s500 = int_to_ptr.vmem [resolvable:$true] %s499
          %502 = dma.vmem_to_hbm [thread:$0]  %s500, 32, %s497, %s486
        $region52: #{tpu_custom_call.1} parent=35 // pred_fallthru
          _
        // Predicated region
        $region53: #{tpu_custom_call.1} parent=35 // pred_check
          %p503 = pneg %p153
        $region54: #{tpu_custom_call.1} parent=35 // pred_check_branch
          %505 = sbr.rel (%p503) target = $region56
        $region55: #{tpu_custom_call.1} parent=35 // pred_region
          %s507 = ssub.s32 32, 32
          %508 = vsyncadd [#allocation11], %s507
          %s510 = sshll.u32 [#allocation10], 4
          %s511 = int_to_ptr.vmem [resolvable:$true] %s510
          %513 = dma.vmem_to_hbm [thread:$0]  %s511, 32, %s5, [#allocation11]
        $region56: #{tpu_custom_call.1} parent=35 // pred_fallthru
          _
        // Predicated region
        $region57: #{tpu_custom_call.1} parent=35 // pred_check
          %p514 = pneg %p153
        $region58: #{tpu_custom_call.1} parent=35 // pred_check_branch
          %516 = sbr.rel (%p514) target = $region60
        $region59: #{tpu_custom_call.1} parent=35 // pred_region
          %517 = dma.done [#allocation11], 32
        $region60: #{tpu_custom_call.1} parent=35 // pred_fallthru
          _
      $region36: #{tpu_custom_call.1} parent=5 // pred_fallthru
        _
      %p518 = scmp.le.s32.totalorder 2, %s20
      // Predicated region
      $region61: #{tpu_custom_call.1} parent=5 // pred_check
        %p519 = pneg %p518
      $region62: #{tpu_custom_call.1} parent=5 // pred_check_branch
        %521 = sbr.rel (%p519) target = $region64
      $region63: #{tpu_custom_call.1} parent=5 // pred_region
        %s522 = ssub.s32 %s20, 2
        // Predicated region
        $region65: #{tpu_custom_call.1} parent=63 // pred_check
          %p523 = pneg %p138
        $region66: #{tpu_custom_call.1} parent=63 // pred_check_branch
          %525 = sbr.rel (%p523) target = $region68
        $region67: #{tpu_custom_call.1} parent=63 // pred_region
          %s526 = sand.u32 %s123, 1
          %s527 = scalar_lea.sflag [#allocation6], %s526
          %s528 = sand.u32 %s123, 1
          %s529 = smul.addr %s528, 2
          %s530 = scalar_lea.vmem [#allocation9], %s529
          %531 = dma.done %s527, 32
        $region68: #{tpu_custom_call.1} parent=63 // pred_fallthru
          _
      $region64: #{tpu_custom_call.1} parent=5 // pred_fallthru
        _
    $region6: #{tpu_custom_call.1} parent=1 // loop_footer
      %s24 = sadd.s32 1, %s20
    $region7: #{tpu_custom_call.1} parent=1 // loop_footer_branch
      %19 = sbr.rel target = $region3
    $region8: #{tpu_custom_call.1} parent=1 // loop_exit
      _
    %532 = vsyncpa [#allocation5], 1
    %s533 = scalar_lea.sflag [#allocation5], 1
    %534 = vsyncpa %s533, 1
    %535 = vsyncpa [#allocation8], 1
    %536 = vsyncpa [#allocation6], 1
    %s537 = scalar_lea.sflag [#allocation6], 1
    %538 = vsyncpa %s537, 1
    %539 = vsyncpa [#allocation11], 1

</llo_original>
